<compile_context>
chip_gen: v7x
topology: tpu7x:2x2x1
jax: 0.10.0
libtpu: 0.0.40
codegen_flags: <defaults>
</compile_context>

<pallas_src>
import functools

import jax
import jax.numpy as jnp
from jax.experimental import pallas as pl
from jax.experimental.pallas import tpu as pltpu


def _silu_kernel(x_ref, o_ref, *, compute_dtype):
    x = x_ref[...].astype(compute_dtype)
    o_ref[...] = (x * jax.nn.sigmoid(x)).astype(o_ref.dtype)


@functools.lru_cache(maxsize=1)
def _vmem_capacity_bytes() -> int:
    try:
        return int(pltpu.get_tpu_info().vmem_capacity_bytes)
    except Exception:
        return 64 << 20  # conservative (v7x per-core VMEM)


@functools.lru_cache(maxsize=1)
def _has_bf16_vector_units() -> bool:
    # bf16 VPU/EUP exist on v6e and later; v5e and older need the f32 upcast.
    try:
        kind = jax.devices()[0].device_kind.lower()
    except Exception:
        return False
    return any(tag in kind for tag in ("v6", "v7", "tpu7"))


def _compute_dtype(dtype):
    if dtype == jnp.bfloat16 and _has_bf16_vector_units():
        return jnp.bfloat16
    return jnp.float32


def _block_bytes_target(vmem_cap: int) -> int:
    # v7x (64 MiB VMEM): 6 MiB blocks -> 4*6 + 4 = 28 MiB, inside scoped default.
    # v5e/v6e (128 MiB):  8 MiB blocks -> 4*8 + 4 = 36 MiB, plenty of headroom.
    return (6 << 20) if vmem_cap <= (64 << 20) else (8 << 20)


def _vmem_limit(block_bytes: int, vmem_cap: int) -> int:
    # Double-buffered input + output blocks plus headroom, capped by capacity.
    return max(min(4 * block_bytes + (4 << 20), vmem_cap * 3 // 4), 16 << 20)


def _compiler_params(block_bytes: int, vmem_cap: int):
    return pltpu.CompilerParams(
        dimension_semantics=("parallel",),
        vmem_limit_bytes=_vmem_limit(block_bytes, vmem_cap),
    )


def _silu_2d(x2d: jax.Array) -> jax.Array:
    """SiLU on a lane-dense (rows, lanes) slab; lanes is a multiple of 128."""
    rows, lanes = x2d.shape
    dtype = x2d.dtype
    itemsize = jnp.dtype(dtype).itemsize
    sublane_mult = max(8, 32 // itemsize)  # 8 f32 / 16 bf16 / 32 int8-fp8

    vmem_cap = _vmem_capacity_bytes()
    block_target = _block_bytes_target(vmem_cap)
    total_bytes = rows * lanes * itemsize

    if total_bytes <= (1 << 20):
        # Tiny tensor: single full-extent block (always a legal block shape).
        tile_rows = rows
    else:
        target_rows = max(
            sublane_mult,
            (block_target // (lanes * itemsize)) // sublane_mult * sublane_mult,
        )
        # Guarantee >= 4 grid steps so double-buffering overlaps the DMA and
        # both v7x TensorCores get work on mid-sized activation maps.
        quarter_rows = max(sublane_mult, (rows // 4) // sublane_mult * sublane_mult)
        tile_rows = min(target_rows, quarter_rows)

    grid = (pl.cdiv(rows, tile_rows),)
    block_bytes = tile_rows * lanes * itemsize
    kernel = functools.partial(_silu_kernel, compute_dtype=_compute_dtype(dtype))

    return pl.pallas_call(
        kernel,
        out_shape=jax.ShapeDtypeStruct((rows, lanes), dtype),
        grid_spec=pltpu.PrefetchScalarGridSpec(
            num_scalar_prefetch=0,
            grid=grid,
            in_specs=[pl.BlockSpec((tile_rows, lanes), lambda i: (i, 0))],
            out_specs=pl.BlockSpec((tile_rows, lanes), lambda i: (i, 0)),
        ),
        compiler_params=_compiler_params(block_bytes, vmem_cap),
    )(x2d)


def _silu_1d(x_flat: jax.Array) -> jax.Array:
    """SiLU on a flat buffer of arbitrary length (partial tail block is masked)."""
    (n,) = x_flat.shape
    dtype = x_flat.dtype
    itemsize = jnp.dtype(dtype).itemsize
    granule = max(8, 32 // itemsize) * 128  # packed (sublane, lane) granule

    vmem_cap = _vmem_capacity_bytes()
    block_target = _block_bytes_target(vmem_cap)
    total_bytes = n * itemsize

    if total_bytes <= (1 << 20):
        # Single full-extent block: legal for any n, no 128-multiple needed.
        chunk = n
    else:
        target_chunk = max(granule, (block_target // itemsize) // granule * granule)
        quarter_chunk = max(granule, (n // 4) // granule * granule)
        chunk = min(target_chunk, quarter_chunk)

    grid = (pl.cdiv(n, chunk),)
    block_bytes = chunk * itemsize
    kernel = functools.partial(_silu_kernel, compute_dtype=_compute_dtype(dtype))

    return pl.pallas_call(
        kernel,
        out_shape=jax.ShapeDtypeStruct((n,), dtype),
        grid_spec=pltpu.PrefetchScalarGridSpec(
            num_scalar_prefetch=0,
            grid=grid,
            in_specs=[pl.BlockSpec((chunk,), lambda i: (i,))],
            out_specs=pl.BlockSpec((chunk,), lambda i: (i,)),
        ),
        compiler_params=_compiler_params(block_bytes, vmem_cap),
    )(x_flat)


def silu_pallas(x: jax.Array) -> jax.Array:
    """Elementwise SiLU via Pallas. Accepts any shape (e.g. NCHW)."""
    orig_shape = x.shape
    n = x.size
    if n == 0:
        return x

    # Fast path: widest lane width (multiple of 128) that divides n exactly —
    # the wrapper is then a pure reshape, zero extra HBM passes.
    for lanes in (1024, 512, 256, 128):
        if n % lanes == 0:
            return _silu_2d(x.reshape(n // lanes, lanes)).reshape(orig_shape)

    # Odd sizes: 1-D kernel over the flat buffer; Pallas masks the partial
    # tail block on store, so there is no pad or slice pass over HBM.
    return _silu_1d(x.reshape(-1)).reshape(orig_shape)


if __name__ == "__main__":
    key = jax.random.PRNGKey(0)

    # Small NCHW activation map (fast lane-dense 2-D path).
    x = jax.random.normal(key, (2, 4, 16, 16), dtype=jnp.float32)
    y = jax.block_until_ready(silu_pallas(x))
    y_ref = x * jax.nn.sigmoid(x)
    assert y.shape == x.shape and y.dtype == x.dtype
    assert jnp.allclose(y, y_ref, atol=1e-6, rtol=1e-6)

    # Odd-sized tiny input: 1-D path, single full-extent block.
    x2 = jax.random.normal(jax.random.PRNGKey(1), (3, 5, 7), dtype=jnp.float32)
    y2 = jax.block_until_ready(silu_pallas(x2))
    assert y2.shape == x2.shape and y2.dtype == x2.dtype
    assert jnp.allclose(y2, x2 * jax.nn.sigmoid(x2), atol=1e-6, rtol=1e-6)

    # Odd-sized >1 MiB input: 1-D path with multiple blocks and masked tail.
    x3 = jax.random.normal(jax.random.PRNGKey(2), (300, 300, 3), dtype=jnp.float32)
    y3 = jax.block_until_ready(silu_pallas(x3))
    assert y3.shape == x3.shape and y3.dtype == x3.dtype
    assert jnp.allclose(y3, x3 * jax.nn.sigmoid(x3), atol=1e-6, rtol=1e-6)

    # bf16 input: native bf16 compute on v6e/v7x, f32 upcast on v5e.
    x4 = jax.random.normal(jax.random.PRNGKey(3), (2, 4, 16, 16)).astype(jnp.bfloat16)
    y4 = jax.block_until_ready(silu_pallas(x4))
    x4f = x4.astype(jnp.float32)
    y4_ref = x4f * jax.nn.sigmoid(x4f)
    assert y4.shape == x4.shape and y4.dtype == jnp.bfloat16
    assert jnp.allclose(y4.astype(jnp.float32), y4_ref, atol=2e-2, rtol=2e-2)

    print("KERNEL_OK")
</pallas_src>

<mosaic_0001>
module attributes {stable_mosaic.version = 11 : i64} {
  func.func @_silu_kernel(%arg0: i32, %arg1: memref<2x1024xf32, #tpu.memory_space<vmem>>, %arg2: memref<2x1024xf32, #tpu.memory_space<vmem>>) attributes {dimension_semantics = [#tpu.dimension_semantics<parallel>], iteration_bounds = array<i64: 1>, scalar_prefetch = 0 : i64, scratch_operands = 0 : i64, tpu.core_type = #tpu.core_type<tc>, window_params = [{transform_indices = @transform_0, window_bounds = array<i64: 2, 1024>}, {transform_indices = @transform_1, window_bounds = array<i64: 2, 1024>}]} {
    %c0 = arith.constant 0 : index
    %c0_0 = arith.constant 0 : index
    %0 = vector.load %arg1[%c0, %c0_0] : memref<2x1024xf32, #tpu.memory_space<vmem>>, vector<2x1024xf32>
    %1 = arith.negf %0 : vector<2x1024xf32>
    %2 = math.exp %1 : vector<2x1024xf32>
    %cst = arith.constant 1.000000e+00 : f32
    %3 = vector.broadcast %cst : f32 to vector<2x1024xf32>
    %4 = arith.addf %3, %2 : vector<2x1024xf32>
    %5 = arith.divf %3, %4 : vector<2x1024xf32>
    %6 = arith.mulf %0, %5 : vector<2x1024xf32>
    %c0_1 = arith.constant 0 : index
    %c0_2 = arith.constant 0 : index
    %7 = vector.load %arg2[%c0_1, %c0_2] : memref<2x1024xf32, #tpu.memory_space<vmem>>, vector<2x1024xf32>
    tpu.vector_store %arg2[%c0_1, %c0_2], %6 {strides = array<i32>} : memref<2x1024xf32, #tpu.memory_space<vmem>>, vector<2x1024xf32>,
    return
  }
  func.func @transform_0(%arg0: i32) -> (i32, i32) {
    %c0_i32 = arith.constant 0 : i32
    %c0_i32_0 = arith.constant 0 : i32
    return %arg0, %c0_i32 : i32, i32
  }
  func.func @transform_1(%arg0: i32) -> (i32, i32) {
    %c0_i32 = arith.constant 0 : i32
    %c0_i32_0 = arith.constant 0 : i32
    return %arg0, %c0_i32 : i32, i32
  }
}

</mosaic_0001>

<llo_original>
// kernel: tpu_custom_call.1
$region0: #{tpu_custom_call.1}
  #allocation0 [shape = 'u32[]', space=smem, size = 0x4, offset = 0x4, fixed_abs, tag = 'smem constant byte address 0x4 - core index']
  #allocation1 [shape = 'u32[144,128]{1,0:T(1,128)}', space=vmem, size = 0x12000, scoped, tag = 'internal scratch']
  %s0 = inlined_call_operand.hbm [shape: f32[2,1024], index: 0, kind: input, shape index: {}]
  %s1 = inlined_call_operand.hbm [shape: f32[2,1024], index: 1, kind: output, shape index: {}]
  %s2 = sld [smem:[#allocation0]]
  $region18: #{tpu_custom_call.1} parent=0
    _
  %s4 = ssub.s32 1, %s2
  %s5 = scalar_select 0, %s4, %s2
  $region1: #{tpu_custom_call.1} parent=0
    #allocation2 [shape = 'u8[8192]{0}', space=vmem, size = 0x2000, scoped, tag = 'input window, operand 0, single buffered']
    #allocation3 [shape = 's32[1]{0}', space=sflag, size = 0x4, scoped, tag = 'scoped memory for tpu_custom_call.1']
    #allocation4 [shape = 's32[1]{0}', space=sflag, size = 0x4, scoped, tag = 'scoped memory for tpu_custom_call.1']
    #allocation5 [shape = 'u8[8192]{0}', space=vmem, size = 0x2000, scoped, tag = 'output window, operand 0, single buffered']
    %6 = vsyncpa [#allocation3], 0
    %7 = vsyncpa [#allocation4], 0
    // Predicated region
    $region2: #{tpu_custom_call.1} parent=1 // pred_check
      _
    $region3: #{tpu_custom_call.1} parent=1 // pred_check_branch
      %9 = sbr.rel (0) target = $region5
    $region4: #{tpu_custom_call.1} parent=1 // pred_region
      %s11 = ssub.s32 256, 256
      %12 = vsyncadd [#allocation3], %s11
      %s14 = sshll.u32 [#allocation2], 4
      %s15 = int_to_ptr.vmem [resolvable:$true] %s14
      %17 = dma.hbm_to_vmem [thread:$0]  %s0, 256, %s15, [#allocation3]
    $region5: #{tpu_custom_call.1} parent=1 // pred_fallthru
      _
    // Predicated region
    $region6: #{tpu_custom_call.1} parent=1 // pred_check
      _
    $region7: #{tpu_custom_call.1} parent=1 // pred_check_branch
      %19 = sbr.rel (0) target = $region9
    $region8: #{tpu_custom_call.1} parent=1 // pred_region
      %20 = dma.done [#allocation3], 256
    $region9: #{tpu_custom_call.1} parent=1 // pred_fallthru
      _
    %v21 = vld [vmem:[#allocation2] sm:$0xff]
    %v22 = vld [vmem:[#allocation2 + $0x8] sm:$0xff]
    %v23 = vxor.u32 %v21, 2147483648
    %v24 = vxor.u32 %v22, 2147483648
    %v25 = vmul.f32 %v23, 1.442695
    %v26 = vpow.pop %v25
    %v27 = vmul.f32 %v24, 1.442695
    %v28 = vpow.pop %v27
    %v29 = vadd.f32 %v26, 1.0
    %v30 = vadd.f32 %v28, 1.0
    %v31 = vrcp.pop %v29
    %v32 = vmul.f32 1.0, %v31
    %v33 = vrcp.pop %v30
    %v34 = vmul.f32 1.0, %v33
    %v35 = vmul.f32 %v21, %v32
    %v36 = vmul.f32 %v22, %v34
    %37 = vst [vmem:[#allocation5] sm:$0xff] %v35
    %38 = vst [vmem:[#allocation5 + $0x8] sm:$0xff] %v36
    // Predicated region
    $region10: #{tpu_custom_call.1} parent=1 // pred_check
      _
    $region11: #{tpu_custom_call.1} parent=1 // pred_check_branch
      %40 = sbr.rel (0) target = $region13
    $region12: #{tpu_custom_call.1} parent=1 // pred_region
      %s42 = ssub.s32 256, 256
      %43 = vsyncadd [#allocation4], %s42
      %s45 = sshll.u32 [#allocation5], 4
      %s46 = int_to_ptr.vmem [resolvable:$true] %s45
      %48 = dma.vmem_to_hbm [thread:$0]  %s46, 256, %s1, [#allocation4]
    $region13: #{tpu_custom_call.1} parent=1 // pred_fallthru
      _
    // Predicated region
    $region14: #{tpu_custom_call.1} parent=1 // pred_check
      _
    $region15: #{tpu_custom_call.1} parent=1 // pred_check_branch
      %50 = sbr.rel (0) target = $region17
    $region16: #{tpu_custom_call.1} parent=1 // pred_region
      %51 = dma.done [#allocation4], 256
    $region17: #{tpu_custom_call.1} parent=1 // pred_fallthru
      _
    %52 = vsyncpa [#allocation3], 1
    %53 = vsyncpa [#allocation4], 1

</llo_original>
